<compile_context>
chip_gen: v7x
topology: tpu7x:2x2x1
jax: 0.10.0
libtpu: 0.0.40
codegen_flags: <defaults>
</compile_context>

<pallas_src>
import functools
import math

import jax
import jax.numpy as jnp
from jax.experimental import pallas as pl
from jax.experimental.pallas import tpu as pltpu


_MIB = 1024 * 1024


def _vmem_limit_bytes():
    """Generation-aware scoped-VMEM cap (v7x: 64 MiB/TC, v5e/v6e: 128 MiB)."""
    try:
        cap = int(pltpu.get_tpu_info().vmem_capacity_bytes)
    except Exception:  # not on TPU / query unavailable -> conservative default
        cap = 128 * _MIB
    if cap <= 64 * _MIB:
        # v7x: leave headroom for compiler scratch + double-buffer slabs.
        return 52 * _MIB
    return min(cap - 24 * _MIB, 104 * _MIB)


_VMEM_LIMIT = _vmem_limit_bytes()

# Constant-index operands (LN params / biases) are fetched once; a single
# buffer halves their VMEM footprint vs. default double-buffering.
_SINGLE = dict(pipeline_mode=pl.Buffered(1))


def _pick_row_tile(m, target):
    """Largest row tile <= target that divides m (multiple of 16, then 8)."""
    if m <= target:
        return m
    for step in (16, 8):
        t = (target // step) * step
        while t >= step:
            if m % t == 0:
                return t
            t -= step
    # TODO(synk): pad the row dim instead of falling back to one full block.
    return m


def _pick_col_tile(n, target):
    """Largest lane tile <= target that divides n and is a multiple of 128."""
    if n <= target:
        return n
    t = (target // 128) * 128
    while t >= 128:
        if n % t == 0:
            return t
        t -= 128
    return n


# --------------------------------------------------------------------------
# Kernel 1: LN1(x) -> fused per-head Q/K/V projection, head-major output
#           out[(slot*H + h), rows, :] = LN1(x_rows) @ W[slot,h] + b[slot,h]
# --------------------------------------------------------------------------
def _ln_qkv_kernel(x_ref, g_ref, b_ref, w_ref, wb_ref, o_ref, normed_ref, *, eps):
    # LayerNorm once per row tile (j == 0), cached in VMEM and reused across
    # all 3*H head-column tiles.
    @pl.when(pl.program_id(1) == 0)
    def _():
        x = x_ref[...].astype(jnp.float32)
        d = x.shape[-1]
        mean = jnp.mean(x, axis=-1, keepdims=True)
        c = x - mean
        # torch .std(): unbiased (ddof=1); module divides by (std + eps).
        var = jnp.sum(c * c, axis=-1, keepdims=True) * (1.0 / (d - 1))
        inv = 1.0 / (jnp.sqrt(var) + eps)            # exact divide (accuracy)
        normed_ref[...] = (c * (g_ref[...] * inv) + b_ref[...]).astype(jnp.bfloat16)

    y = jnp.dot(normed_ref[...], w_ref[0], preferred_element_type=jnp.float32)
    o_ref[0] = (y + wb_ref[0]).astype(o_ref.dtype)


def _ln_qkv_proj(x2, g, b, w_heads, b_heads, *, eps, tile_rows):
    M, D = x2.shape
    n_out, _, hd = w_heads.shape                     # n_out = 3 * n_heads
    tm = _pick_row_tile(M, tile_rows)
    cost = pl.CostEstimate(
        flops=2 * M * D * n_out * hd,
        transcendentals=M,
        bytes_accessed=M * D * 4 + D * n_out * hd * 2 + M * n_out * hd * 2 + 2 * D * 4,
    )
    return pl.pallas_call(
        functools.partial(_ln_qkv_kernel, eps=eps),
        out_shape=jax.ShapeDtypeStruct((n_out, M, hd), jnp.bfloat16),
        grid=(M // tm, n_out),
        in_specs=[
            pl.BlockSpec((tm, D), lambda i, j: (i, 0)),              # x rows (fetched once per i)
            pl.BlockSpec((1, D), lambda i, j: (0, 0), **_SINGLE),    # LN1 gamma
            pl.BlockSpec((1, D), lambda i, j: (0, 0), **_SINGLE),    # LN1 beta
            pl.BlockSpec((1, D, hd), lambda i, j: (j, 0, 0)),        # per-(slot,head) weight
            pl.BlockSpec((1, 1, hd), lambda i, j: (j, 0, 0)),        # per-(slot,head) bias
        ],
        out_specs=pl.BlockSpec((1, tm, hd), lambda i, j: (j, i, 0)),
        scratch_shapes=[pltpu.VMEM((tm, D), jnp.bfloat16)],
        compiler_params=pltpu.CompilerParams(
            dimension_semantics=("parallel", "arbitrary"),
            vmem_limit_bytes=_VMEM_LIMIT,
        ),
        cost_estimate=cost,
    )(x2, g, b, w_heads, b_heads)


# --------------------------------------------------------------------------
# Kernel 2: masked attention + out-projection + first residual
#           x1[rows] = x[rows] + bo + sum_h softmax(q_h k_h^T + bias) v_h @ Wo_h
# Grid (B, S//tq, H); heads accumulate into the resident output block.
# --------------------------------------------------------------------------
def _attn_proj_kernel(x_ref, q_ref, k_ref, v_ref, bias_ref, wo_ref, bo_ref, o_ref):
    # 1/sqrt(hd) is already folded into Wq / bq.
    s = jax.lax.dot_general(q_ref[0], k_ref[0], (((1,), (1,)), ((), ())),
                            preferred_element_type=jnp.float32)
    # TODO(synk): if the Mosaic dump shows a per-step vxpose for this NT
    # contraction, pre-lay K out as (hd, S) in kernel 1 instead.
    s = s + bias_ref[0]                               # additive mask (0 / -1e9)
    m = jnp.max(s, axis=-1, keepdims=True)
    p = jnp.exp(s - m)
    p = p / jnp.sum(p, axis=-1, keepdims=True)        # exact divide (accuracy)
    ctx = jnp.dot(p.astype(jnp.bfloat16), v_ref[0], preferred_element_type=jnp.float32)
    proj = jnp.dot(ctx.astype(jnp.bfloat16), wo_ref[0], preferred_element_type=jnp.float32)

    @pl.when(pl.program_id(2) == 0)
    def _():
        o_ref[...] = x_ref[...] + bo_ref[...]         # first residual + out-proj bias
    o_ref[...] += proj                                # accumulate heads in VMEM


def _attn_out_proj(x2, qkv_heads, bias, wo_heads, bo, *, n_heads, tile_q):
    M, D = x2.shape
    H = n_heads
    _, _, hd = qkv_heads.shape
    Bm, S, _ = bias.shape
    B = M // S
    tq = _pick_row_tile(S, tile_q)
    qtiles = S // tq

    def row_block(b, qi):
        return b * qtiles + qi

    bias_map = ((lambda b, qi, h: (0, qi, 0)) if Bm == 1
                else (lambda b, qi, h: (b, qi, 0)))

    cost = pl.CostEstimate(
        flops=4 * B * H * S * S * hd + 2 * M * D * D,
        transcendentals=B * H * S * S,
        bytes_accessed=(M * D * 4 * 2                      # x in, x1 out (f32)
                        + M * D * 2                        # Q (bf16)
                        + B * qtiles * H * 2 * S * hd * 2  # K/V re-streamed per q tile
                        + Bm * S * S * 4 + D * D * 2),
    )
    return pl.pallas_call(
        _attn_proj_kernel,
        out_shape=jax.ShapeDtypeStruct((M, D), jnp.float32),
        grid=(B, qtiles, H),
        in_specs=[
            pl.BlockSpec((tq, D), lambda b, qi, h: (row_block(b, qi), 0)),        # residual x
            pl.BlockSpec((1, tq, hd), lambda b, qi, h: (h, row_block(b, qi), 0)), # Q tile
            pl.BlockSpec((1, S, hd), lambda b, qi, h: (H + h, b, 0)),             # K (full seq)
            pl.BlockSpec((1, S, hd), lambda b, qi, h: (2 * H + h, b, 0)),         # V (full seq)
            pl.BlockSpec((1, tq, S), bias_map),                                   # additive mask
            pl.BlockSpec((1, hd, D), lambda b, qi, h: (h, 0, 0)),                 # Wo rows, head h
            pl.BlockSpec((1, D), lambda b, qi, h: (0, 0), **_SINGLE),             # bo
        ],
        out_specs=pl.BlockSpec((tq, D), lambda b, qi, h: (row_block(b, qi), 0)),
        compiler_params=pltpu.CompilerParams(
            dimension_semantics=("parallel", "parallel", "arbitrary"),
            vmem_limit_bytes=_VMEM_LIMIT,
        ),
        cost_estimate=cost,
    )(x2, qkv_heads, qkv_heads, qkv_heads, bias, wo_heads, bo)


# --------------------------------------------------------------------------
# Kernel 3: out = x1 + FFN(LN2(x1)), d_ff-tiled (W1 columns / W2 rows stream)
# --------------------------------------------------------------------------
def _ln_ffn_kernel(x_ref, g_ref, b_ref, w1_ref, b1_ref, w2_ref, b2_ref, o_ref,
                   normed_ref, acc_ref, *, eps):
    f = pl.program_id(1)

    @pl.when(f == 0)
    def _():
        x = x_ref[...].astype(jnp.float32)
        d = x.shape[-1]
        mean = jnp.mean(x, axis=-1, keepdims=True)
        c = x - mean
        var = jnp.sum(c * c, axis=-1, keepdims=True) * (1.0 / (d - 1))
        inv = 1.0 / (jnp.sqrt(var) + eps)
        normed_ref[...] = (c * (g_ref[...] * inv) + b_ref[...]).astype(jnp.bfloat16)
        acc_ref[...] = x + b2_ref[...]                 # second residual + final bias

    h = jnp.dot(normed_ref[...], w1_ref[...], preferred_element_type=jnp.float32)
    h = (h + b1_ref[...]).astype(jnp.bfloat16)         # keep (tm, tf) intermediate in bf16
    h = jnp.maximum(h, 0)                              # ReLU (bf16)
    acc_ref[...] += jnp.dot(h, w2_ref[...], preferred_element_type=jnp.float32)

    @pl.when(f == pl.num_programs(1) - 1)
    def _():
        o_ref[...] = acc_ref[...].astype(o_ref.dtype)


def _ln_ffn_residual(x1, g, b, w1, b1, w2, b2, *, eps, tile_rows, tile_ff):
    M, D = x1.shape
    dff = w1.shape[1]
    tm = _pick_row_tile(M, tile_rows)
    tf = _pick_col_tile(dff, tile_ff)
    cost = pl.CostEstimate(
        flops=4 * M * D * dff,
        transcendentals=M,
        bytes_accessed=M * D * 4 * 2 + 2 * D * dff * 2 + (3 * D + dff) * 4,
    )
    return pl.pallas_call(
        functools.partial(_ln_ffn_kernel, eps=eps),
        out_shape=jax.ShapeDtypeStruct((M, D), x1.dtype),
        grid=(M // tm, dff // tf),
        in_specs=[
            pl.BlockSpec((tm, D), lambda i, f: (i, 0)),              # x1 (fetched once per i)
            pl.BlockSpec((1, D), lambda i, f: (0, 0), **_SINGLE),    # LN2 gamma
            pl.BlockSpec((1, D), lambda i, f: (0, 0), **_SINGLE),    # LN2 beta
            pl.BlockSpec((D, tf), lambda i, f: (0, f)),              # W1 column tile
            pl.BlockSpec((1, tf), lambda i, f: (0, f)),              # b1 tile
            pl.BlockSpec((tf, D), lambda i, f: (f, 0)),              # W2 row tile
            pl.BlockSpec((1, D), lambda i, f: (0, 0), **_SINGLE),    # b2
        ],
        out_specs=pl.BlockSpec((tm, D), lambda i, f: (i, 0)),
        scratch_shapes=[pltpu.VMEM((tm, D), jnp.bfloat16),           # LN2 output
                        pltpu.VMEM((tm, D), jnp.float32)],           # FFN accumulator
        compiler_params=pltpu.CompilerParams(
            dimension_semantics=("parallel", "arbitrary"),
            vmem_limit_bytes=_VMEM_LIMIT,
        ),
        cost_estimate=cost,
    )(x1, g, b, w1, b1, w2, b2)


# --------------------------------------------------------------------------
# Full encoder layer
# --------------------------------------------------------------------------
def transformer_encoder_layer(x, mask, params, *, n_heads, eps=1e-6,
                              tile_rows=None, tile_q=256, tile_ff=1024):
    """Pre-norm transformer encoder layer forward (eval mode). x: (B, S, D)."""
    B, S, D = x.shape
    assert D % n_heads == 0, "hidden size must be divisible by n_heads"
    hd = D // n_heads
    M = B * S
    if tile_rows is None:
        # v5e/v6e (128 MiB VMEM) take 512-row tiles; v7x (64 MiB) stays at 256.
        tile_rows = 512 if _VMEM_LIMIT >= 96 * _MIB else 256

    x2 = x.reshape(M, D).astype(jnp.float32)

    # ---- one-time parameter re-layouts (weights only; no activation passes) ----
    scale = 1.0 / math.sqrt(hd)                     # folded into Wq / bq
    wqkv = jnp.concatenate(
        [params["wq"] * scale, params["wk"], params["wv"]], axis=1)      # (D, 3D)
    wqkv_heads = (wqkv.reshape(D, 3, n_heads, hd).transpose(1, 2, 0, 3)
                  .reshape(3 * n_heads, D, hd).astype(jnp.bfloat16))
    bqkv_heads = (jnp.concatenate([params["bq"] * scale, params["bk"], params["bv"]])
                  .reshape(3 * n_heads, 1, hd).astype(jnp.float32))
    ln1_g = params["ln1_g"].reshape(1, D).astype(jnp.float32)
    ln1_b = params["ln1_b"].reshape(1, D).astype(jnp.float32)
    wo_heads = params["wo"].reshape(n_heads, hd, D).astype(jnp.bfloat16)
    bo = params["bo"].reshape(1, D).astype(jnp.float32)

    # Additive attention-mask bias; supports (S,S), (1,S,S), and per-batch (B,S,S).
    # TODO(synk): specialize to an in-kernel iota causal mask when the mask is
    # known to be lower-triangular (deletes the S*S*4-byte DMA + residency).
    mask_arr = jnp.asarray(mask)
    if mask_arr.ndim == 2:
        mask_arr = mask_arr[None]
    bias = jnp.where(mask_arr > 0, 0.0, -1e9).astype(jnp.float32)

    # --- kernel 1: LN1 -> fused per-head Q/K/V projection (head-major output) ---
    qkv_heads = _ln_qkv_proj(x2, ln1_g, ln1_b, wqkv_heads, bqkv_heads,
                             eps=eps, tile_rows=tile_rows)

    # --- kernel 2: masked attention + out-projection + first residual -> x1 ---
    x1 = _attn_out_proj(x2, qkv_heads, bias, wo_heads, bo,
                        n_heads=n_heads, tile_q=tile_q)

    # --- kernel 3: LN2 -> FFN (d_ff-tiled) + second residual ---
    out = _ln_ffn_residual(
        x1,
        params["ln2_g"].reshape(1, D).astype(jnp.float32),
        params["ln2_b"].reshape(1, D).astype(jnp.float32),
        params["w1"].astype(jnp.bfloat16),
        params["b1"].reshape(1, -1).astype(jnp.float32),
        params["w2"].astype(jnp.bfloat16),
        params["b2"].reshape(1, D).astype(jnp.float32),
        eps=eps, tile_rows=tile_rows, tile_ff=tile_ff)
    return out.reshape(B, S, D)


# --------------------------------------------------------------------------
# Pure-JAX (f32) reference, mirroring the PyTorch module exactly
# --------------------------------------------------------------------------
def _layer_norm_ref(x, g, b, eps):
    mean = jnp.mean(x, axis=-1, keepdims=True)
    std = jnp.std(x, axis=-1, keepdims=True, ddof=1)   # torch .std(): unbiased
    return g * (x - mean) / (std + eps) + b


def _reference(x, mask, p, *, n_heads, eps=1e-6):
    B, S, D = x.shape
    hd = D // n_heads
    h = _layer_norm_ref(x, p["ln1_g"], p["ln1_b"], eps)

    def split(t):
        return t.reshape(B, S, n_heads, hd).transpose(0, 2, 1, 3)

    q = split(h @ p["wq"] + p["bq"])
    k = split(h @ p["wk"] + p["bk"])
    v = split(h @ p["wv"] + p["bv"])
    s = jnp.einsum("bhqd,bhkd->bhqk", q, k) / jnp.sqrt(jnp.float32(hd))
    s = jnp.where(mask.reshape(1, 1, S, S) > 0, s, -1e9)
    pattn = jax.nn.softmax(s, axis=-1)
    ctx = jnp.einsum("bhqk,bhkd->bhqd", pattn, v)
    ctx = ctx.transpose(0, 2, 1, 3).reshape(B, S, D)
    x1 = x + ctx @ p["wo"] + p["bo"]
    h2 = _layer_norm_ref(x1, p["ln2_g"], p["ln2_b"], eps)
    ff = jnp.maximum(h2 @ p["w1"] + p["b1"], 0.0) @ p["w2"] + p["b2"]
    return x1 + ff


if __name__ == "__main__":
    B, S, D, H = 2, 8, 32, 4          # batch, seq, hidden, heads
    d_ff = 4 * D
    eps = 1e-6

    key = jax.random.PRNGKey(0)
    ks = jax.random.split(key, 17)

    def rnd(k, shape, s):
        return jax.random.normal(k, shape, jnp.float32) * s

    params = {
        "ln1_g": 1.0 + rnd(ks[0], (D,), 0.1),
        "ln1_b": rnd(ks[1], (D,), 0.1),
        "wq": rnd(ks[2], (D, D), D ** -0.5), "bq": rnd(ks[3], (D,), 0.02),
        "wk": rnd(ks[4], (D, D), D ** -0.5), "bk": rnd(ks[5], (D,), 0.02),
        "wv": rnd(ks[6], (D, D), D ** -0.5), "bv": rnd(ks[7], (D,), 0.02),
        "wo": rnd(ks[8], (D, D), D ** -0.5), "bo": rnd(ks[9], (D,), 0.02),
        "ln2_g": 1.0 + rnd(ks[10], (D,), 0.1),
        "ln2_b": rnd(ks[11], (D,), 0.1),
        "w1": rnd(ks[12], (D, d_ff), D ** -0.5), "b1": rnd(ks[13], (d_ff,), 0.02),
        "w2": rnd(ks[14], (d_ff, D), d_ff ** -0.5), "b2": rnd(ks[15], (D,), 0.02),
    }
    x = rnd(ks[16], (B, S, D), 1.0)
    # Causal mask, as produced by the spec's tril_mask: (1, S, S) lower-triangular.
    mask = jnp.tril(jnp.ones((1, S, S), jnp.int32))

    out = transformer_encoder_layer(x, mask, params, n_heads=H, eps=eps)
    out = jax.block_until_ready(out)

    ref = _reference(x, mask, params, n_heads=H, eps=eps)
    assert out.shape == (B, S, D)
    max_err = float(jnp.max(jnp.abs(out - ref)))
    assert jnp.allclose(out, ref, atol=5e-2, rtol=5e-2), (
        f"mismatch vs reference (max abs err {max_err:.4f})")
    print("KERNEL_OK")
</pallas_src>

<mosaic_0001>
module attributes {stable_mosaic.version = 11 : i64} {
  func.func @_ln_qkv_kernel(%arg0: i32, %arg1: i32, %arg2: memref<16x32xf32, #tpu.memory_space<vmem>>, %arg3: memref<1x32xf32, #tpu.memory_space<vmem>>, %arg4: memref<1x32xf32, #tpu.memory_space<vmem>>, %arg5: memref<1x32x8xbf16, #tpu.memory_space<vmem>>, %arg6: memref<1x1x8xf32, #tpu.memory_space<vmem>>, %arg7: memref<1x16x8xbf16, #tpu.memory_space<vmem>>, %arg8: memref<16x32xbf16, #tpu.memory_space<vmem>>) attributes {dimension_semantics = [#tpu.dimension_semantics<parallel>, #tpu.dimension_semantics<arbitrary>], iteration_bounds = array<i64: 1, 12>, scalar_prefetch = 0 : i64, scratch_operands = 1 : i64, tpu.core_type = #tpu.core_type<tc>, window_params = [{transform_indices = @transform_0, window_bounds = array<i64: 16, 32>}, {pipeline_mode = #tpu.pipeline_mode<synchronous>, transform_indices = @transform_1, window_bounds = array<i64: 1, 32>}, {pipeline_mode = #tpu.pipeline_mode<synchronous>, transform_indices = @transform_2, window_bounds = array<i64: 1, 32>}, {transform_indices = @transform_3, window_bounds = array<i64: 1, 32, 8>}, {transform_indices = @transform_4, window_bounds = array<i64: 1, 1, 8>}, {transform_indices = @transform_5, window_bounds = array<i64: 1, 16, 8>}]} {
    %c0_i32 = arith.constant 0 : i32
    %0 = arith.cmpi eq, %arg1, %c0_i32 : i32
    %1 = arith.extui %0 : i1 to i32
    %c0_i32_0 = arith.constant 0 : i32
    %2 = arith.cmpi ne, %1, %c0_i32_0 : i32
    scf.if %2 {
      %c0_11 = arith.constant 0 : index
      %c0_12 = arith.constant 0 : index
      %15 = vector.load %arg2[%c0_11, %c0_12] : memref<16x32xf32, #tpu.memory_space<vmem>>, vector<16x32xf32>
      %cst_13 = arith.constant dense<0.000000e+00> : vector<16xf32>
      %16 = vector.multi_reduction <add>, %15, %cst_13 [1] : vector<16x32xf32> to vector<16xf32>
      %17 = vector.shape_cast %16 : vector<16xf32> to vector<16x1xf32>
      %cst_14 = arith.constant 3.200000e+01 : f32
      %18 = vector.broadcast %cst_14 : f32 to vector<16x1xf32>
      %19 = arith.divf %17, %18 : vector<16x1xf32>
      %20 = vector.broadcast %19 : vector<16x1xf32> to vector<16x32xf32>
      %21 = arith.subf %15, %20 : vector<16x32xf32>
      %22 = arith.mulf %21, %21 : vector<16x32xf32>
      %cst_15 = arith.constant dense<0.000000e+00> : vector<16xf32>
      %23 = vector.multi_reduction <add>, %22, %cst_15 [1] : vector<16x32xf32> to vector<16xf32>
      %24 = vector.shape_cast %23 : vector<16xf32> to vector<16x1xf32>
      %cst_16 = arith.constant 0.0322580636 : f32
      %25 = vector.broadcast %cst_16 : f32 to vector<16x1xf32>
      %26 = arith.mulf %24, %25 : vector<16x1xf32>
      %27 = math.sqrt %26 : vector<16x1xf32>
      %cst_17 = arith.constant 9.99999997E-7 : f32
      %28 = vector.broadcast %cst_17 : f32 to vector<16x1xf32>
      %29 = arith.addf %27, %28 : vector<16x1xf32>
      %cst_18 = arith.constant 1.000000e+00 : f32
      %30 = vector.broadcast %cst_18 : f32 to vector<16x1xf32>
      %31 = arith.divf %30, %29 : vector<16x1xf32>
      %c0_19 = arith.constant 0 : index
      %c0_20 = arith.constant 0 : index
      %32 = vector.load %arg3[%c0_19, %c0_20] : memref<1x32xf32, #tpu.memory_space<vmem>>, vector<1x32xf32>
      %33 = vector.broadcast %32 : vector<1x32xf32> to vector<16x32xf32>
      %34 = vector.broadcast %31 : vector<16x1xf32> to vector<16x32xf32>
      %35 = arith.mulf %33, %34 : vector<16x32xf32>
      %36 = arith.mulf %21, %35 : vector<16x32xf32>
      %c0_21 = arith.constant 0 : index
      %c0_22 = arith.constant 0 : index
      %37 = vector.load %arg4[%c0_21, %c0_22] : memref<1x32xf32, #tpu.memory_space<vmem>>, vector<1x32xf32>
      %38 = vector.broadcast %37 : vector<1x32xf32> to vector<16x32xf32>
      %39 = arith.addf %36, %38 : vector<16x32xf32>
      %40 = arith.truncf %39 : vector<16x32xf32> to vector<16x32xbf16>
      %c0_23 = arith.constant 0 : index
      %c0_24 = arith.constant 0 : index
      %41 = vector.load %arg8[%c0_23, %c0_24] : memref<16x32xbf16, #tpu.memory_space<vmem>>, vector<16x32xbf16>
      tpu.vector_store %arg8[%c0_23, %c0_24], %40 {strides = array<i32>} : memref<16x32xbf16, #tpu.memory_space<vmem>>, vector<16x32xbf16>,
    } else {
    }
    %c0 = arith.constant 0 : index
    %c0_1 = arith.constant 0 : index
    %3 = vector.load %arg8[%c0, %c0_1] : memref<16x32xbf16, #tpu.memory_space<vmem>>, vector<16x32xbf16>
    %c0_2 = arith.constant 0 : index
    %c0_3 = arith.constant 0 : index
    %c0_4 = arith.constant 0 : index
    %4 = vector.load %arg5[%c0_2, %c0_3, %c0_4] : memref<1x32x8xbf16, #tpu.memory_space<vmem>>, vector<1x32x8xbf16>
    %5 = vector.shape_cast %4 : vector<1x32x8xbf16> to vector<32x8xbf16>
    %cst = arith.constant dense<0.000000e+00> : vector<16x8xf32>
    %6 = tpu.matmul %3, %5, %cst {dimension_numbers = #tpu.dot_dimension_numbers<[1], [0], [0], [1], [0, 0, 1, 1], [], []>} : vector<16x32xbf16>, vector<32x8xbf16>, vector<16x8xf32> -> vector<16x8xf32>
    %c0_5 = arith.constant 0 : index
    %c0_6 = arith.constant 0 : index
    %c0_7 = arith.constant 0 : index
    %7 = vector.load %arg6[%c0_5, %c0_6, %c0_7] : memref<1x1x8xf32, #tpu.memory_space<vmem>>, vector<1x1x8xf32>
    %8 = vector.shape_cast %7 : vector<1x1x8xf32> to vector<1x8xf32>
    %9 = vector.broadcast %8 : vector<1x8xf32> to vector<16x8xf32>
    %10 = arith.addf %6, %9 : vector<16x8xf32>
    %11 = arith.truncf %10 : vector<16x8xf32> to vector<16x8xbf16>
    %c0_8 = arith.constant 0 : index
    %c0_9 = arith.constant 0 : index
    %c0_10 = arith.constant 0 : index
    %12 = vector.load %arg7[%c0_8, %c0_9, %c0_10] : memref<1x16x8xbf16, #tpu.memory_space<vmem>>, vector<1x16x8xbf16>
    %13 = vector.shape_cast %12 : vector<1x16x8xbf16> to vector<16x8xbf16>
    %14 = vector.shape_cast %11 : vector<16x8xbf16> to vector<1x16x8xbf16>
    tpu.vector_store %arg7[%c0_8, %c0_9, %c0_10], %14 {strides = array<i32>} : memref<1x16x8xbf16, #tpu.memory_space<vmem>>, vector<1x16x8xbf16>,
    return
  }
  func.func @transform_0(%arg0: i32, %arg1: i32) -> (i32, i32) {
    %c0_i32 = arith.constant 0 : i32
    %c0_i32_0 = arith.constant 0 : i32
    return %arg0, %c0_i32 : i32, i32
  }
  func.func @transform_1(%arg0: i32, %arg1: i32) -> (i32, i32) {
    %c0_i32 = arith.constant 0 : i32
    %c0_i32_0 = arith.constant 0 : i32
    %c0_i32_1 = arith.constant 0 : i32
    return %c0_i32, %c0_i32_0 : i32, i32
  }
  func.func @transform_2(%arg0: i32, %arg1: i32) -> (i32, i32) {
    %c0_i32 = arith.constant 0 : i32
    %c0_i32_0 = arith.constant 0 : i32
    %c0_i32_1 = arith.constant 0 : i32
    return %c0_i32, %c0_i32_0 : i32, i32
  }
  func.func @transform_3(%arg0: i32, %arg1: i32) -> (i32, i32, i32) {
    %c0_i32 = arith.constant 0 : i32
    %c0_i32_0 = arith.constant 0 : i32
    %c0_i32_1 = arith.constant 0 : i32
    return %arg1, %c0_i32, %c0_i32_0 : i32, i32, i32
  }
  func.func @transform_4(%arg0: i32, %arg1: i32) -> (i32, i32, i32) {
    %c0_i32 = arith.constant 0 : i32
    %c0_i32_0 = arith.constant 0 : i32
    %c0_i32_1 = arith.constant 0 : i32
    return %arg1, %c0_i32, %c0_i32_0 : i32, i32, i32
  }
  func.func @transform_5(%arg0: i32, %arg1: i32) -> (i32, i32, i32) {
    %c0_i32 = arith.constant 0 : i32
    %c0_i32_0 = arith.constant 0 : i32
    return %arg1, %arg0, %c0_i32 : i32, i32, i32
  }
}

</mosaic_0001>

<llo_original>
// kernel: tpu_custom_call.1
$region0: #{tpu_custom_call.1}
  #allocation0 [shape = 'u32[]', space=smem, size = 0x4, offset = 0x4, fixed_abs, tag = 'smem constant byte address 0x4 - core index']
  #allocation1 [shape = 'u32[144,128]{1,0:T(1,128)}', space=vmem, size = 0x12000, scoped, tag = 'internal scratch']
  #allocation2 [shape = 'bf16[16,32]{1,0:T(16,128)(2,1)}', space=vmem, size = 0x1000, scoped, tag = 'scratch operand']
  %s0 = inlined_call_operand.hbm [shape: f32[16,32], index: 0, kind: input, shape index: {}]
  %s1 = inlined_call_operand.hbm [shape: f32[1,32], index: 1, kind: input, shape index: {}]
  %s2 = inlined_call_operand.hbm [shape: f32[1,32], index: 2, kind: input, shape index: {}]
  %s3 = inlined_call_operand.hbm [shape: bf16[12,32,8], index: 3, kind: input, shape index: {}]
  %s4 = inlined_call_operand.hbm [shape: f32[12,1,8], index: 4, kind: input, shape index: {}]
  %s5 = inlined_call_operand.hbm [shape: bf16[12,16,8], index: 5, kind: output, shape index: {}]
  %s6 = sld [smem:[#allocation0]]
  $region77: #{tpu_custom_call.1} parent=0
    _
  %s8 = ssub.s32 1, %s6
  %s9 = scalar_select 0, %s8, %s6
  $region1: #{tpu_custom_call.1} parent=0
    #allocation3 [shape = 'u8[8192]{0}', space=vmem, size = 0x2000, scoped, tag = 'input window, operand 0, single buffered']
    #allocation4 [shape = 's32[2]{0}', space=sflag, size = 0x8, scoped, tag = 'scoped memory for tpu_custom_call.1']
    #allocation5 [shape = 's32[2]{0}', space=sflag, size = 0x8, scoped, tag = 'scoped memory for tpu_custom_call.1']
    #allocation6 [shape = 'u8[512]{0}', space=vmem, size = 0x400, scoped, tag = 'input window, operand 1, single buffered']
    #allocation7 [shape = 's32[1]{0}', space=sflag, size = 0x4, scoped, tag = 'scoped memory for tpu_custom_call.1']
    #allocation8 [shape = 'u8[512]{0}', space=vmem, size = 0x400, scoped, tag = 'input window, operand 2, single buffered']
    #allocation9 [shape = 'u8[16384]{0}', space=vmem, size = 0x4000, scoped, tag = 'input window, operand 3']
    #allocation10 [shape = 's32[2]{0}', space=sflag, size = 0x8, scoped, tag = 'scoped memory for tpu_custom_call.1']
    #allocation11 [shape = 'u8[1024]{0}', space=vmem, size = 0x400, scoped, tag = 'input window, operand 4']
    #allocation12 [shape = 'u8[8192]{0}', space=vmem, size = 0x2000, scoped, tag = 'output window, operand 0']
    %10 = vsyncpa [#allocation4], 0
    %11 = vsyncpa [#allocation7], 0
    %12 = vsyncpa [#allocation10], 0
    %s13 = scalar_lea.sflag [#allocation10], 1
    %14 = vsyncpa %s13, 0
    %15 = vsyncpa [#allocation5], 0
    %s16 = scalar_lea.sflag [#allocation5], 1
    %17 = vsyncpa %s16, 0
    loop: start=0, step=1, limit=14
    $region2: #{tpu_custom_call.1} parent=1 // loop_pre_header
      _
    $region3: #{tpu_custom_call.1} parent=1 // loop_header
      %s19 = sphi 0, %s23
      %p20 = scmp.ge.s32.totalorder %s19, 14
      %s26 = sphi 0, %s38
      %s27 = sphi 0, %s34
      %s28 = sphi 0, %s26
      %s29 = sphi 0, %s27
      %s30 = sphi 0, %s28
      %s31 = sphi 0, %s29
      %s41 = sphi 0, %s43
      %s44 = sphi 0, %s41
      %s45 = sphi 0, %s44
      %s61 = sphi 0, %s45
      %s65 = sphi 0, %s65
      %s67 = sphi 0, %s65
      %s68 = sphi 0, %s67
      %s82 = sphi 0, %s68
      %s86 = sphi 0, %s86
      %s88 = sphi 0, %s86
      %s89 = sphi 0, %s88
      %s103 = sphi 0, %s89
      %s109 = sphi 0, %s111
      %s112 = sphi 0, %s109
      %s113 = sphi 0, %s112
      %s129 = sphi 0, %s113
      %s135 = sphi 0, %s137
      %s138 = sphi 0, %s135
      %s139 = sphi 0, %s138
      %s155 = sphi 0, %s139
      %s163 = sphi 0, %s165
      %s166 = sphi 0, %s163
      %s167 = sphi 0, %s166
      %s183 = sphi 0, %s167
    $region4: #{tpu_custom_call.1} parent=1 // loop_header_branch
      %22 = sbr.rel (%p20) target = $region8
    $region5: #{tpu_custom_call.1} parent=1 // loop_body
      %s24 = ssub.s32 %s19, 1
      %s25 = ssub.s32 %s19, 2
      %s32 = sadd.s32 1, %s27
      %p33 = scmp.ge.s32.totalorder %s32, 12
      %s34 = scalar_select %p33, 0, %s32
      %s35 = sadd.s32 1, %s26
      %s36 = scalar_select %p33, %s35, %s26
      %p37 = scmp.ge.s32.totalorder %s36, 1
      %s38 = scalar_select %p37, 0, %s36
      %s39 = ssub.s32 %s26, %s38
      %p40 = scmp.eq.s32.totalorder %s39, 0
      %s42 = sadd.s32 %s41, 1
      %s43 = scalar_select %p40, %s41, %s42
      %p46 = pneg %p40
      %p47 = scmp.eq.s32.totalorder %s19, 11
      %p48 = por %p46, %p47
      %p49 = scmp.ne.s32.totalorder %s41, %s44
      %p50 = scmp.eq.s32.totalorder %s19, 0
      %p51 = por %p49, %p50
      %p52 = scmp.ne.s32.totalorder %s41, %s44
      %p53 = scmp.eq.s32.totalorder %s24, 11
      %p54 = por %p52, %p53
      %p55 = scmp.ne.s32.totalorder %s44, %s45
      %p56 = scmp.eq.s32.totalorder %s24, 0
      %p57 = por %p55, %p56
      %p58 = scmp.ne.s32.totalorder %s44, %s45
      %p59 = scmp.eq.s32.totalorder %s25, 11
      %p60 = por %p58, %p59
      %p62 = scmp.ne.s32.totalorder %s45, %s61
      %p63 = scmp.eq.s32.totalorder %s25, 0
      %p64 = por %p62, %p63
      %s66 = sadd.s32 %s65, 1
      %p69 = scmp.eq.s32.totalorder %s19, 11
      %p70 = scmp.ne.s32.totalorder %s65, %s67
      %p71 = scmp.eq.s32.totalorder %s19, 0
      %p72 = por %p70, %p71
      %p73 = scmp.ne.s32.totalorder %s65, %s67
      %p74 = scmp.eq.s32.totalorder %s24, 11
      %p75 = por %p73, %p74
      %p76 = scmp.ne.s32.totalorder %s67, %s68
      %p77 = scmp.eq.s32.totalorder %s24, 0
      %p78 = por %p76, %p77
      %p79 = scmp.ne.s32.totalorder %s67, %s68
      %p80 = scmp.eq.s32.totalorder %s25, 11
      %p81 = por %p79, %p80
      %p83 = scmp.ne.s32.totalorder %s68, %s82
      %p84 = scmp.eq.s32.totalorder %s25, 0
      %p85 = por %p83, %p84
      %s87 = sadd.s32 %s86, 1
      %p90 = scmp.eq.s32.totalorder %s19, 11
      %p91 = scmp.ne.s32.totalorder %s86, %s88
      %p92 = scmp.eq.s32.totalorder %s19, 0
      %p93 = por %p91, %p92
      %p94 = scmp.ne.s32.totalorder %s86, %s88
      %p95 = scmp.eq.s32.totalorder %s24, 11
      %p96 = por %p94, %p95
      %p97 = scmp.ne.s32.totalorder %s88, %s89
      %p98 = scmp.eq.s32.totalorder %s24, 0
      %p99 = por %p97, %p98
      %p100 = scmp.ne.s32.totalorder %s88, %s89
      %p101 = scmp.eq.s32.totalorder %s25, 11
      %p102 = por %p100, %p101
      %p104 = scmp.ne.s32.totalorder %s89, %s103
      %p105 = scmp.eq.s32.totalorder %s25, 0
      %p106 = por %p104, %p105
      %s107 = ssub.s32 %s27, %s34
      %p108 = scmp.eq.s32.totalorder %s107, 0
      %s110 = sadd.s32 %s109, 1
      %s111 = scalar_select %p108, %s109, %s110
      %p114 = pneg %p108
      %p115 = scmp.eq.s32.totalorder %s19, 11
      %p116 = por %p114, %p115
      %p117 = scmp.ne.s32.totalorder %s109, %s112
      %p118 = scmp.eq.s32.totalorder %s19, 0
      %p119 = por %p117, %p118
      %p120 = scmp.ne.s32.totalorder %s109, %s112
      %p121 = scmp.eq.s32.totalorder %s24, 11
      %p122 = por %p120, %p121
      %p123 = scmp.ne.s32.totalorder %s112, %s113
      %p124 = scmp.eq.s32.totalorder %s24, 0
      %p125 = por %p123, %p124
      %p126 = scmp.ne.s32.totalorder %s112, %s113
      %p127 = scmp.eq.s32.totalorder %s25, 11
      %p128 = por %p126, %p127
      %p130 = scmp.ne.s32.totalorder %s113, %s129
      %p131 = scmp.eq.s32.totalorder %s25, 0
      %p132 = por %p130, %p131
      %s133 = ssub.s32 %s27, %s34
      %p134 = scmp.eq.s32.totalorder %s133, 0
      %s136 = sadd.s32 %s135, 1
      %s137 = scalar_select %p134, %s135, %s136
      %p140 = pneg %p134
      %p141 = scmp.eq.s32.totalorder %s19, 11
      %p142 = por %p140, %p141
      %p143 = scmp.ne.s32.totalorder %s135, %s138
      %p144 = scmp.eq.s32.totalorder %s19, 0
      %p145 = por %p143, %p144
      %p146 = scmp.ne.s32.totalorder %s135, %s138
      %p147 = scmp.eq.s32.totalorder %s24, 11
      %p148 = por %p146, %p147
      %p149 = scmp.ne.s32.totalorder %s138, %s139
      %p150 = scmp.eq.s32.totalorder %s24, 0
      %p151 = por %p149, %p150
      %p152 = scmp.ne.s32.totalorder %s138, %s139
      %p153 = scmp.eq.s32.totalorder %s25, 11
      %p154 = por %p152, %p153
      %p156 = scmp.ne.s32.totalorder %s139, %s155
      %p157 = scmp.eq.s32.totalorder %s25, 0
      %p158 = por %p156, %p157
      %s159 = ssub.s32 %s27, %s34
      %s160 = ssub.s32 %s26, %s38
      %s161 = sor.u32 %s159, %s160
      %p162 = scmp.eq.s32.totalorder %s161, 0
      %s164 = sadd.s32 %s163, 1
      %s165 = scalar_select %p162, %s163, %s164
      %p168 = pneg %p162
      %p169 = scmp.eq.s32.totalorder %s19, 11
      %p170 = por %p168, %p169
      %p171 = scmp.ne.s32.totalorder %s163, %s166
      %p172 = scmp.eq.s32.totalorder %s19, 0
      %p173 = por %p171, %p172
      %p174 = scmp.ne.s32.totalorder %s163, %s166
      %p175 = scmp.eq.s32.totalorder %s24, 11
      %p176 = por %p174, %p175
      %p177 = scmp.ne.s32.totalorder %s166, %s167
      %p178 = scmp.eq.s32.totalorder %s24, 0
      %p179 = por %p177, %p178
      %p180 = scmp.ne.s32.totalorder %s166, %s167
      %p181 = scmp.eq.s32.totalorder %s25, 11
      %p182 = por %p180, %p181
      %p184 = scmp.ne.s32.totalorder %s167, %s183
      %p185 = scmp.eq.s32.totalorder %s25, 0
      %p186 = por %p184, %p185
      %p187 = scmp.le.s32.totalorder 1, %s19
      %p188 = scmp.lt.s32.totalorder %s19, 13
      %p189 = pnand %p187, %p188
      %p190 = pneg %p189
      // Predicated region
      $region9: #{tpu_custom_call.1} parent=5 // pred_check
        _
      $region10: #{tpu_custom_call.1} parent=5 // pred_check_branch
        %192 = sbr.rel (%p189) target = $region12
      $region11: #{tpu_custom_call.1} parent=5 // pred_region
        %s193 = ssub.s32 %s19, 1
        // Predicated region
        $region13: #{tpu_custom_call.1} parent=11 // pred_check
          %p194 = pneg %p57
        $region14: #{tpu_custom_call.1} parent=11 // pred_check_branch
          %196 = sbr.rel (%p194) target = $region16
        $region15: #{tpu_custom_call.1} parent=11 // pred_region
          %s197 = smul.u32 2, %s28
          %s199 = ssub.s32 256, 256
          %200 = vsyncadd [#allocation4], %s199
          %s201 = smul.addr %s197, 128
          %s202 = scalar_lea.hbm %s0, %s201
          %s203 = sshll.u32 [#allocation3], 4
          %s204 = int_to_ptr.vmem [resolvable:$true] %s203
          %209 = dma.hbm_to_vmem [thread:$0]  %s202, 256, %s204, [#allocation4], 128, 128, 8
        $region16: #{tpu_custom_call.1} parent=11 // pred_fallthru
          _
        // Predicated region
        $region17: #{tpu_custom_call.1} parent=11 // pred_check
          %p210 = pneg %p78
        $region18: #{tpu_custom_call.1} parent=11 // pred_check_branch
          %212 = sbr.rel (%p210) target = $region20
        $region19: #{tpu_custom_call.1} parent=11 // pred_region
          %s214 = ssub.s32 16, 16
          %215 = vsyncadd [#allocation7], %s214
          %s217 = sshll.u32 [#allocation6], 4
          %s218 = int_to_ptr.vmem [resolvable:$true] %s217
          %220 = dma.hbm_to_vmem [thread:$0]  %s1, 16, %s218, [#allocation7]
        $region20: #{tpu_custom_call.1} parent=11 // pred_fallthru
          _
        // Predicated region
        $region21: #{tpu_custom_call.1} parent=11 // pred_check
          %p221 = pneg %p99
        $region22: #{tpu_custom_call.1} parent=11 // pred_check_branch
          %223 = sbr.rel (%p221) target = $region24
        $region23: #{tpu_custom_call.1} parent=11 // pred_region
          %s225 = ssub.s32 16, 16
          %226 = vsyncadd [#allocation7], %s225
          %s228 = sshll.u32 [#allocation8], 4
          %s229 = int_to_ptr.vmem [resolvable:$true] %s228
          %231 = dma.hbm_to_vmem [thread:$0]  %s2, 16, %s229, [#allocation7]
        $region24: #{tpu_custom_call.1} parent=11 // pred_fallthru
          _
      $region12: #{tpu_custom_call.1} parent=5 // pred_fallthru
        _
      %p232 = scmp.lt.s32.totalorder %s19, 12
      // Predicated region
      $region25: #{tpu_custom_call.1} parent=5 // pred_check
        %p233 = pneg %p232
      $region26: #{tpu_custom_call.1} parent=5 // pred_check_branch
        %235 = sbr.rel (%p233) target = $region28
      $region27: #{tpu_custom_call.1} parent=5 // pred_region
        // Predicated region
        $region29: #{tpu_custom_call.1} parent=27 // pred_check
          %p236 = pneg %p119
        $region30: #{tpu_custom_call.1} parent=27 // pred_check_branch
          %238 = sbr.rel (%p236) target = $region32
        $region31: #{tpu_custom_call.1} parent=27 // pred_region
          %s239 = sand.u32 %s19, 1
          %s240 = scalar_lea.sflag [#allocation10], %s239
          %s241 = sand.u32 %s109, 1
          %s242 = smul.addr %s241, 16
          %s243 = scalar_lea.vmem [#allocation9], %s242
          %s245 = ssub.s32 256, 256
          %246 = vsyncadd %s240, %s245
          %s247 = smul.addr %s27, 4
          %s248 = smul.addr %s247, 64
          %s249 = scalar_lea.hbm %s3, %s248
          %s250 = sshll.u32 %s243, 4
          %s251 = int_to_ptr.vmem [resolvable:$true] %s250
          %256 = dma.hbm_to_vmem [thread:$0]  %s249, 256, %s251, %s240, 64, 64, 4
        $region32: #{tpu_custom_call.1} parent=27 // pred_fallthru
          _
        // Predicated region
        $region33: #{tpu_custom_call.1} parent=27 // pred_check
          %p257 = pneg %p145
        $region34: #{tpu_custom_call.1} parent=27 // pred_check_branch
          %259 = sbr.rel (%p257) target = $region36
        $region35: #{tpu_custom_call.1} parent=27 // pred_region
          %s260 = sand.u32 %s19, 1
          %s261 = scalar_lea.sflag [#allocation10], %s260
          %s262 = sand.u32 %s135, 1
          %s263 = scalar_lea.vmem [#allocation11], %s262
          %s265 = ssub.s32 16, 16
          %266 = vsyncadd %s261, %s265
          %s267 = smul.addr %s27, 16
          %s268 = scalar_lea.hbm %s4, %s267
          %s270 = sshll.u32 %s263, 4
          %s271 = int_to_ptr.vmem [resolvable:$true] %s270
          %273 = dma.hbm_to_vmem [thread:$0]  %s268, 16, %s271, %s261
        $region36: #{tpu_custom_call.1} parent=27 // pred_fallthru
          _
      $region28: #{tpu_custom_call.1} parent=5 // pred_fallthru
        _
      %p274 = scmp.le.s32.totalorder 1, %s19
      %p275 = scmp.lt.s32.totalorder %s19, 13
      %p276 = pnand %p274, %p275
      %p277 = pneg %p276
      // Predicated region
      $region37: #{tpu_custom_call.1} parent=5 // pred_check
        _
      $region38: #{tpu_custom_call.1} parent=5 // pred_check_branch
        %279 = sbr.rel (%p276) target = $region40
      $region39: #{tpu_custom_call.1} parent=5 // pred_region
        %s280 = ssub.s32 %s19, 1
        // Predicated region
        $region41: #{tpu_custom_call.1} parent=39 // pred_check
          %p281 = pneg %p57
        $region42: #{tpu_custom_call.1} parent=39 // pred_check_branch
          %283 = sbr.rel (%p281) target = $region44
        $region43: #{tpu_custom_call.1} parent=39 // pred_region
          %284 = dma.done [#allocation4], 256
        $region44: #{tpu_custom_call.1} parent=39 // pred_fallthru
          _
        // Predicated region
        $region45: #{tpu_custom_call.1} parent=39 // pred_check
          %p285 = pneg %p78
        $region46: #{tpu_custom_call.1} parent=39 // pred_check_branch
          %287 = sbr.rel (%p285) target = $region48
        $region47: #{tpu_custom_call.1} parent=39 // pred_region
          %288 = dma.done [#allocation7], 16
        $region48: #{tpu_custom_call.1} parent=39 // pred_fallthru
          _
        // Predicated region
        $region49: #{tpu_custom_call.1} parent=39 // pred_check
          %p289 = pneg %p99
        $region50: #{tpu_custom_call.1} parent=39 // pred_check_branch
          %291 = sbr.rel (%p289) target = $region52
        $region51: #{tpu_custom_call.1} parent=39 // pred_region
          %292 = dma.done [#allocation7], 16
        $region52: #{tpu_custom_call.1} parent=39 // pred_fallthru
          _
        %s293 = sand.u32 %s24, 1
        %s294 = scalar_lea.sflag [#allocation10], %s293
        %s295 = sand.u32 %s112, 1
        %s296 = smul.addr %s295, 16
        %s297 = scalar_lea.vmem [#allocation9], %s296
        // Predicated region
        $region53: #{tpu_custom_call.1} parent=39 // pred_check
          %p298 = pneg %p125
        $region54: #{tpu_custom_call.1} parent=39 // pred_check_branch
          %300 = sbr.rel (%p298) target = $region56
        $region55: #{tpu_custom_call.1} parent=39 // pred_region
          %301 = dma.done %s294, 256
        $region56: #{tpu_custom_call.1} parent=39 // pred_fallthru
          _
        %s302 = sand.u32 %s24, 1
        %s303 = scalar_lea.sflag [#allocation10], %s302
        %s304 = sand.u32 %s138, 1
        %s305 = scalar_lea.vmem [#allocation11], %s304
        // Predicated region
        $region57: #{tpu_custom_call.1} parent=39 // pred_check
          %p306 = pneg %p151
        $region58: #{tpu_custom_call.1} parent=39 // pred_check_branch
          %308 = sbr.rel (%p306) target = $region60
        $region59: #{tpu_custom_call.1} parent=39 // pred_region
          %309 = dma.done %s303, 16
        $region60: #{tpu_custom_call.1} parent=39 // pred_fallthru
          _
        %p310 = pneg %p57
        %p311 = pneg %p54
        %p312 = pneg %p78
        %p313 = pneg %p75
        %p314 = pneg %p99
        %p315 = pneg %p96
        %s316 = sand.u32 %s24, 1
        %s317 = scalar_lea.sflag [#allocation10], %s316
        %s318 = sand.u32 %s112, 1
        %s319 = smul.addr %s318, 16
        %s320 = scalar_lea.vmem [#allocation9], %s319
        %p321 = pneg %p125
        %p322 = pneg %p122
        %s323 = sand.u32 %s24, 1
        %s324 = scalar_lea.sflag [#allocation10], %s323
        %s325 = sand.u32 %s138, 1
        %s326 = scalar_lea.vmem [#allocation11], %s325
        %p327 = pneg %p151
        %p328 = pneg %p148
        %p329 = pneg %p179
        %p330 = pneg %p176
        %s331 = sand.u32 %s166, 1
        %s332 = scalar_lea.sflag [#allocation5], %s331
        %s333 = sand.u32 %s166, 1
        %s334 = smul.addr %s333, 8
        %s335 = scalar_lea.vmem [#allocation12], %s334
        %s336 = smul.u32 2, %s28
        %s337 = smul.u32 2, %s28
        %p339 = scmp.eq.s32.totalorder %s29, 0
        // Predicated region
        $region61: #{tpu_custom_call.1} parent=39 // pred_check
          %p340 = pneg %p339
        $region62: #{tpu_custom_call.1} parent=39 // pred_check_branch
          %342 = sbr.rel (%p340) target = $region64
        $region63: #{tpu_custom_call.1} parent=39 // pred_region
          %v343 = vld [vmem:[#allocation3] sm:$0xff]
          %v344 = vld [vmem:[#allocation3 + $0x8] sm:$0xff]
          %vm345 = vcmask 261120
          %v346 = vsel %vm345, %v343, 0.0
          %347 = vadd.xlane.f32.xlu0 %v346
          %v348 = vpop.xlane.xlu0 %347
          %v349 = vsel %vm345, %v344, 0.0
          %350 = vadd.xlane.f32.xlu0 %v349
          %v351 = vpop.xlane.xlu0 %350
          %v352 = vrcp.pop 32.0
          %v353 = vmul.f32 %v348, %v352
          %v354 = vmul.f32 %v351, %v352
          %v355 = vsub.f32 %v343, %v353
          %v356 = vsub.f32 %v344, %v354
          %v357 = vmul.f32 %v355, %v355
          %v358 = vmul.f32 %v356, %v356
          %v359 = vsel %vm345, %v357, 0.0
          %360 = vadd.xlane.f32.xlu0 %v359
          %v361 = vpop.xlane.xlu0 %360
          %v362 = vsel %vm345, %v358, 0.0
          %363 = vadd.xlane.f32.xlu0 %v362
          %v364 = vpop.xlane.xlu0 %363
          %v365 = vmul.f32 %v361, 0.032258064
          %v366 = vmul.f32 %v364, 0.032258064
          %v367 = vrsqrt.pop %v365
          %v368 = vmul.f32 %v365, %v367
          %vm369 = vcmp.eq.f32.partialorder %v365, inf
          %v370 = vsel %vm369, %v365, %v368
          %vm371 = vcmp.eq.f32.partialorder %v365, 0.0
          %v372 = vand.u32 %v365, 2147483648
          %v373 = vsel %vm371, %v372, %v370
          %v374 = vrsqrt.pop %v366
          %v375 = vmul.f32 %v366, %v374
          %vm376 = vcmp.eq.f32.partialorder %v366, inf
          %v377 = vsel %vm376, %v366, %v375
          %vm378 = vcmp.eq.f32.partialorder %v366, 0.0
          %v379 = vand.u32 %v366, 2147483648
          %v380 = vsel %vm378, %v379, %v377
          %v381 = vadd.f32 %v373, 1e-06
          %v382 = vadd.f32 %v380, 1e-06
          %v383 = vrcp.pop %v381
          %v384 = vmul.f32 1.0, %v383
          %v385 = vrcp.pop %v382
          %v386 = vmul.f32 1.0, %v385
          %v387 = vld [vmem:[#allocation6] sm:$0x1]
          %v389 = vlaneseq
          %v390 = vshrl.u32 %v389, 7
          %v391 = vsub.s32 0, %v390
          %v392 = vrot.slane %v387, %v391
          %v394 = vmul.f32 %v392, %v384
          %v395 = vmul.f32 %v392, %v386
          %v396 = vmul.f32 %v355, %v394
          %v397 = vmul.f32 %v356, %v395
          %v398 = vld [vmem:[#allocation8] sm:$0x1]
          %v400 = vlaneseq
          %v401 = vshrl.u32 %v400, 7
          %v402 = vsub.s32 0, %v401
          %v403 = vrot.slane %v398, %v402
          %v405 = vadd.f32 %v396, %v403
          %v406 = vadd.f32 %v397, %v403
          %v407 = vpack.c.bf16 %v406, %v405
          %408 = vst.msk [vmem:[#allocation2] sm:$0xff] %vm345, %v407
        $region64: #{tpu_custom_call.1} parent=39 // pred_fallthru
          _
        %v409 = vld [vmem:[#allocation2] sm:$0xff]
        %v410 = vld [vmem:[%s297] sm:$0xf]
        %v411 = vld [vmem:[%s297 + $0x4] sm:$0xf]
        %v412 = vld [vmem:[%s297 + $0x8] sm:$0xf]
        %v413 = vld [vmem:[%s297 + $0xc] sm:$0xf]
        %v414 = vld [vmem:[%s305] sm:$0x1]
        %v416 = vlaneseq
        %v417 = vshrl.u32 %v416, 7
        %v418 = vsub.s32 0, %v417
        %v419 = vrot.slane %v414, %v418
        %v425 = vunpack.c.l.b16 %v410
        %v426 = vunpack.c.l.b16 %v411
        %v427 = vunpack.c.l.b16 %v412
        %v428 = vunpack.c.l.b16 %v413
        %v429 = vpack.c.b16 %v426, %v425
        %v430 = vpack.c.b16 %v428, %v427
        %vm433 = vcmask 261120
        %v435 = vsel %vm433, %v409, 0
        %437 = vmatprep.subr.bf16.mxu0 0
        %438 = vmatpush1.bf16.msra.mxu0 %v429
        %439 = vmatprep.subr.bf16.mxu0 0
        %440 = vmatpush1.bf16.msra.mxu0 %v430
        %441 = vmatprep.subr.bf16.mxu0 0
        %442 = vmatpush1.bf16.msra.mxu0 0
        %443 = vmatprep.subr.bf16.mxu0 0
        %444 = vmatpush1.bf16.msra.mxu0 0
        %445 = vmatprep.subr.bf16.mxu0 0
        %446 = vmatpush1.bf16.msra.mxu0 0
        %447 = vmatprep.subr.bf16.mxu0 0
        %448 = vmatpush1.bf16.msra.mxu0 0
        %449 = vmatprep.subr.bf16.mxu0 0
        %450 = vmatpush1.bf16.msra.mxu0 0
        %451 = vmatprep.subr.bf16.mxu0 0
        %452 = vmatpush1.bf16.msra.mxu0 0
        %453 = vmatprep.subr.bf16.mxu0 0
        %454 = vmatpush1.bf16.msra.mxu0 0
        %455 = vmatprep.subr.bf16.mxu0 0
        %456 = vmatpush1.bf16.msra.mxu0 0
        %457 = vmatprep.subr.bf16.mxu0 0
        %458 = vmatpush1.bf16.msra.mxu0 0
        %459 = vmatprep.subr.bf16.mxu0 0
        %460 = vmatpush1.bf16.msra.mxu0 0
        %461 = vmatprep.subr.bf16.mxu0 0
        %462 = vmatpush1.bf16.msra.mxu0 0
        %463 = vmatprep.subr.bf16.mxu0 0
        %464 = vmatpush1.bf16.msra.mxu0 0
        %465 = vmatprep.subr.bf16.mxu0 0
        %466 = vmatpush1.bf16.msra.mxu0 0
        %467 = vmatprep.subr.bf16.mxu0 0
        %468 = vmatpush1.bf16.msra.mxu0 0
        %469 = vmatprep.mubr.bf16.mxu0 0
        %470 = vmatmul.mubr.bf16.gmra.mrb[0].mxu0 %v435
        %v471 = vpop.f32.mrb[0].mxu0
        %v472 = vadd.f32 %v419, %v471
        %v473 = vpop.f32.mrb[0].mxu0
        %v474 = vpop.f32.mrb[0].mxu0
        %v475 = vadd.f32 %v419, %v474
        %v476 = vpop.f32.mrb[0].mxu0
        %477 = vdwg.mxu0
        %v478 = vpack.c.bf16 %v475, %v472
        %v480 = vunpack.c.l.b16 %v478
        %v481 = vunpack.c.h.b16 %v478
        %v482 = vpack.c.b16 %v480, %v480
        %v483 = vpack.c.b16 %v481, %v481
        %vm486 = vcmask 60416
        %487 = vst.msk [vmem:[%s335] sm:$0xf] %vm486, %v482
        %488 = vst.msk [vmem:[%s335 + $0x4] sm:$0xf] %vm486, %v483
        %s489 = sand.u32 %s166, 1
        %s490 = scalar_lea.sflag [#allocation5], %s489
        %s491 = sand.u32 %s166, 1
        %s492 = smul.addr %s491, 8
        %s493 = scalar_lea.vmem [#allocation12], %s492
        // Predicated region
        $region65: #{tpu_custom_call.1} parent=39 // pred_check
          %p494 = pneg %p176
        $region66: #{tpu_custom_call.1} parent=39 // pred_check_branch
          %496 = sbr.rel (%p494) target = $region68
        $region67: #{tpu_custom_call.1} parent=39 // pred_region
          %s497 = smul.u32 2, %s28
          %s499 = ssub.s32 128, 128
          %500 = vsyncadd %s490, %s499
          %s501 = smul.addr %s29, 2
          %s502 = sadd.s32 %s497, %s501
          %s503 = smul.addr %s502, 64
          %s504 = scalar_lea.hbm %s5, %s503
          %s505 = sshll.u32 %s493, 4
          %s506 = int_to_ptr.vmem [resolvable:$true] %s505
          %511 = dma.vmem_to_hbm [thread:$0]  %s506, 128, %s504, %s490, 64, 64, 4
        $region68: #{tpu_custom_call.1} parent=39 // pred_fallthru
          _
      $region40: #{tpu_custom_call.1} parent=5 // pred_fallthru
        _
      %p512 = scmp.le.s32.totalorder 2, %s19
      // Predicated region
      $region69: #{tpu_custom_call.1} parent=5 // pred_check
        %p513 = pneg %p512
      $region70: #{tpu_custom_call.1} parent=5 // pred_check_branch
        %515 = sbr.rel (%p513) target = $region72
      $region71: #{tpu_custom_call.1} parent=5 // pred_region
        %s516 = ssub.s32 %s19, 2
        // Predicated region
        $region73: #{tpu_custom_call.1} parent=71 // pred_check
          %p517 = pneg %p182
        $region74: #{tpu_custom_call.1} parent=71 // pred_check_branch
          %519 = sbr.rel (%p517) target = $region76
        $region75: #{tpu_custom_call.1} parent=71 // pred_region
          %s520 = sand.u32 %s167, 1
          %s521 = scalar_lea.sflag [#allocation5], %s520
          %s522 = sand.u32 %s167, 1
          %s523 = smul.addr %s522, 8
          %s524 = scalar_lea.vmem [#allocation12], %s523
          %525 = dma.done %s521, 128
        $region76: #{tpu_custom_call.1} parent=71 // pred_fallthru
          _
      $region72: #{tpu_custom_call.1} parent=5 // pred_fallthru
        _
    $region6: #{tpu_custom_call.1} parent=1 // loop_footer
      %s23 = sadd.s32 1, %s19
    $region7: #{tpu_custom_call.1} parent=1 // loop_footer_branch
      %18 = sbr.rel target = $region3
    $region8: #{tpu_custom_call.1} parent=1 // loop_exit
      _
    %526 = vsyncpa [#allocation4], 1
    %s527 = scalar_lea.sflag [#allocation4], 1
    %528 = vsyncpa %s527, 1
    %529 = vsyncpa [#allocation7], 1
    %530 = vsyncpa [#allocation10], 1
    %s531 = scalar_lea.sflag [#allocation10], 1
    %532 = vsyncpa %s531, 1
    %533 = vsyncpa [#allocation5], 1
    %s534 = scalar_lea.sflag [#allocation5], 1
    %535 = vsyncpa %s534, 1

</llo_original>
